<compile_context>
chip_gen: v6e
topology: v6e:2x2x1
jax: 0.10.0
libtpu: 0.0.40
codegen_flags: <defaults>
</compile_context>

<pallas_src>
import functools

import jax
import jax.numpy as jnp
from jax.experimental import pallas as pl
from jax.experimental.pallas import tpu as pltpu

_LANE = 128       # lane width of a vreg / MXU column tile
_TB_MAX = 1024    # max batch rows per grid step (per-tile working set << scoped VMEM)


def _round_up(x, m):
    return (x + m - 1) // m * m


def _choose_tb(B):
    """Batch-tile size: 16-aligned (bf16-output friendly), >= 2 grid steps whenever
    B > 16 (so dual-TC v7x gets both cores busy), capped at _TB_MAX."""
    if B <= 16:
        return B                           # single block == full batch dim (always legal)
    tb = _round_up(-(-B // 2), 16)         # at least 2 grid steps
    return min(tb, _TB_MAX)


def _mlp_kernel(x_ref, w1_ref, b1_ref, w2_ref, b2_ref, w3_ref, b3_ref, o_ref):
    """Fused 3-layer MLP for one batch tile:
       ReLU(x@W1+b1) -> ReLU(.@W2+b2) -> .@W3+b3  (dropout = identity, eval mode)."""
    # x arrives f32 (read once from HBM); cast to bf16 in-register for the MXU.
    x = x_ref[...].astype(jnp.bfloat16)
    h1 = jnp.dot(x, w1_ref[...], preferred_element_type=jnp.float32) + b1_ref[...]
    h1 = jnp.maximum(h1, 0.0)                                         # ReLU in f32
    h2 = jnp.dot(h1.astype(jnp.bfloat16), w2_ref[...],
                 preferred_element_type=jnp.float32) + b2_ref[...]
    h2 = jnp.maximum(h2, 0.0)                                         # ReLU in f32
    out = jnp.dot(h2.astype(jnp.bfloat16), w3_ref[...],
                  preferred_element_type=jnp.float32) + b3_ref[...]
    o_ref[...] = out.astype(o_ref.dtype)                              # lane-dense store


def pack_params(params):
    """One-time parameter prep (call OUTSIDE the per-step forward): bf16 weights and
    the output layer zero-padded to 128 lane-dense columns. Biases stay f32."""
    w1, b1, w2, b2, w3, b3 = params
    n_cls = w3.shape[1]
    pad = _round_up(n_cls, _LANE) - n_cls
    return (
        w1.astype(jnp.bfloat16), b1,
        w2.astype(jnp.bfloat16), b2,
        jnp.pad(w3.astype(jnp.bfloat16), ((0, 0), (0, pad))),
        jnp.pad(b3, ((0, 0), (0, pad))),
    )


@functools.partial(jax.jit, static_argnames=("n_cls", "out_dtype"))
def net_forward(x_nchw, packed_params, *, n_cls, out_dtype=jnp.bfloat16):
    """Forward pass of Net (cifar10 path, n_hidden=2), fused in a single Pallas kernel."""
    w1, b1, w2, b2, w3p, b3p = packed_params
    B = x_nchw.shape[0]
    in_dim = w1.shape[0]
    n_nodes = w1.shape[1]
    n_cls_pad = w3p.shape[1]

    x2d = x_nchw.reshape(B, -1)            # torch x.view; metadata-only reshape
    tb = _choose_tb(B)
    grid = (pl.cdiv(B, tb),)               # ragged last block handled by Pallas masking

    fixed = lambda shape: pl.BlockSpec(shape, lambda i: (0, 0))   # VMEM-resident weights
    # TODO(synk): for much larger n_nodes on v7x (32 MiB scoped VMEM), single-buffer the
    # constant weight specs via pipeline_mode=pl.Buffered(1); irrelevant at n_nodes=128.

    out_pad = pl.pallas_call(
        _mlp_kernel,
        out_shape=jax.ShapeDtypeStruct((B, n_cls_pad), out_dtype),
        grid=grid,
        in_specs=[
            pl.BlockSpec((tb, in_dim), lambda i: (i, 0)),   # x (f32): tiled over batch
            fixed((in_dim, n_nodes)),                       # W1 (bf16)
            fixed((1, n_nodes)),                            # b1 (f32)
            fixed((n_nodes, n_nodes)),                      # W2 (bf16)
            fixed((1, n_nodes)),                            # b2 (f32)
            fixed((n_nodes, n_cls_pad)),                    # W3 (bf16, lane-padded)
            fixed((1, n_cls_pad)),                          # b3 (f32, lane-padded)
        ],
        out_specs=pl.BlockSpec((tb, n_cls_pad), lambda i: (i, 0)),
        compiler_params=pltpu.CompilerParams(
            dimension_semantics=("parallel",)),             # shard batch steps over TCs
    )(x2d, w1, b1, w2, b2, w3p, b3p)

    # Padded class columns (>= n_cls) are exactly 0 (zero-padded W3/b3). Consumers that
    # mask those lanes themselves can take out_pad directly and skip this copy.
    return out_pad[:, :n_cls]


def init_params(key, in_dim, n_nodes, n_cls):
    """Deterministic init mimicking torch.nn.Linear defaults (U[-1/sqrt(fan_in), +])."""
    def linear(k, fan_in, fan_out):
        kw, kb = jax.random.split(k)
        bound = 1.0 / jnp.sqrt(fan_in)
        # torch stores W as (out, in); we pre-transpose to (in, out) for the kernel.
        w = jax.random.uniform(kw, (fan_in, fan_out), jnp.float32, -bound, bound)
        b = jax.random.uniform(kb, (1, fan_out), jnp.float32, -bound, bound)
        return w, b

    k1, k2, k3 = jax.random.split(key, 3)
    w1, b1 = linear(k1, in_dim, n_nodes)   # inp_cifar10
    w2, b2 = linear(k2, n_nodes, n_nodes)  # hid_cifar10
    w3, b3 = linear(k3, n_nodes, n_cls)    # out_cifar10
    return (w1, b1, w2, b2, w3, b3)


def reference_forward(x_nchw, params):
    """Pure-JAX reference matching the kernel's bf16-matmul / f32-accumulate path."""
    w1, b1, w2, b2, w3, b3 = params
    x = x_nchw.reshape(x_nchw.shape[0], -1).astype(jnp.bfloat16)
    h1 = jnp.dot(x, w1.astype(jnp.bfloat16),
                 preferred_element_type=jnp.float32) + b1
    h1 = jnp.maximum(h1, 0.0)
    h2 = jnp.dot(h1.astype(jnp.bfloat16), w2.astype(jnp.bfloat16),
                 preferred_element_type=jnp.float32) + b2
    h2 = jnp.maximum(h2, 0.0)
    return jnp.dot(h2.astype(jnp.bfloat16), w3.astype(jnp.bfloat16),
                   preferred_element_type=jnp.float32) + b3


if __name__ == "__main__":
    # Small shapes consistent with the module: 16x16 single-channel image,
    # n_nodes=128 hidden units, 10 classes, batch=32 (exercises a 2-step batch grid).
    B, H, W = 32, 16, 16
    IN_DIM = H * W          # image_cifar10_width * image_cifar10_height
    N_NODES = 128           # args.n_nodes
    N_CLS = 10              # args.class_number_cifar10

    key = jax.random.PRNGKey(0)
    kx, kp = jax.random.split(key)
    x = jax.random.normal(kx, (B, 1, H, W), jnp.float32)   # NCHW input
    params = init_params(kp, IN_DIM, N_NODES, N_CLS)
    packed = pack_params(params)            # one-time prep, outside the forward step

    out = net_forward(x, packed, n_cls=N_CLS)
    out = jax.block_until_ready(out)

    ref = reference_forward(x, params)
    assert out.shape == (B, N_CLS)
    assert jnp.allclose(out.astype(jnp.float32), ref, atol=3e-2, rtol=3e-2), \
        "mismatch vs reference"
    print("KERNEL_OK")
</pallas_src>

<mosaic_0001>
module attributes {stable_mosaic.version = 11 : i64} {
  func.func @_mlp_kernel(%arg0: i32, %arg1: memref<16x256xf32, #tpu.memory_space<vmem>>, %arg2: memref<256x128xbf16, #tpu.memory_space<vmem>>, %arg3: memref<1x128xf32, #tpu.memory_space<vmem>>, %arg4: memref<128x128xbf16, #tpu.memory_space<vmem>>, %arg5: memref<1x128xf32, #tpu.memory_space<vmem>>, %arg6: memref<128x128xbf16, #tpu.memory_space<vmem>>, %arg7: memref<1x128xf32, #tpu.memory_space<vmem>>, %arg8: memref<16x128xbf16, #tpu.memory_space<vmem>>) attributes {dimension_semantics = [#tpu.dimension_semantics<parallel>], iteration_bounds = array<i64: 2>, scalar_prefetch = 0 : i64, scratch_operands = 0 : i64, tpu.core_type = #tpu.core_type<tc>, window_params = [{transform_indices = @transform_0, window_bounds = array<i64: 16, 256>}, {pipeline_mode = #tpu.pipeline_mode<synchronous>, transform_indices = @transform_1, window_bounds = array<i64: 256, 128>}, {pipeline_mode = #tpu.pipeline_mode<synchronous>, transform_indices = @transform_2, window_bounds = array<i64: 1, 128>}, {pipeline_mode = #tpu.pipeline_mode<synchronous>, transform_indices = @transform_3, window_bounds = array<i64: 128, 128>}, {pipeline_mode = #tpu.pipeline_mode<synchronous>, transform_indices = @transform_4, window_bounds = array<i64: 1, 128>}, {pipeline_mode = #tpu.pipeline_mode<synchronous>, transform_indices = @transform_5, window_bounds = array<i64: 128, 128>}, {pipeline_mode = #tpu.pipeline_mode<synchronous>, transform_indices = @transform_6, window_bounds = array<i64: 1, 128>}, {transform_indices = @transform_7, window_bounds = array<i64: 16, 128>}]} {
    %c0 = arith.constant 0 : index
    %c0_0 = arith.constant 0 : index
    %0 = vector.load %arg1[%c0, %c0_0] : memref<16x256xf32, #tpu.memory_space<vmem>>, vector<16x256xf32>
    %1 = arith.truncf %0 : vector<16x256xf32> to vector<16x256xbf16>
    %c0_1 = arith.constant 0 : index
    %c0_2 = arith.constant 0 : index
    %2 = vector.load %arg2[%c0_1, %c0_2] : memref<256x128xbf16, #tpu.memory_space<vmem>>, vector<256x128xbf16>
    %cst = arith.constant dense<0.000000e+00> : vector<16x128xf32>
    %3 = tpu.matmul %1, %2, %cst {dimension_numbers = #tpu.dot_dimension_numbers<[1], [0], [0], [1], [0, 0, 1, 1], [], []>} : vector<16x256xbf16>, vector<256x128xbf16>, vector<16x128xf32> -> vector<16x128xf32>
    %c0_3 = arith.constant 0 : index
    %c0_4 = arith.constant 0 : index
    %4 = vector.load %arg3[%c0_3, %c0_4] : memref<1x128xf32, #tpu.memory_space<vmem>>, vector<1x128xf32>
    %5 = vector.broadcast %4 : vector<1x128xf32> to vector<16x128xf32>
    %6 = arith.addf %3, %5 : vector<16x128xf32>
    %cst_5 = arith.constant 0.000000e+00 : f32
    %7 = vector.broadcast %cst_5 : f32 to vector<16x128xf32>
    %8 = arith.maximumf %6, %7 : vector<16x128xf32>
    %9 = arith.truncf %8 : vector<16x128xf32> to vector<16x128xbf16>
    %c0_6 = arith.constant 0 : index
    %c0_7 = arith.constant 0 : index
    %10 = vector.load %arg4[%c0_6, %c0_7] : memref<128x128xbf16, #tpu.memory_space<vmem>>, vector<128x128xbf16>
    %cst_8 = arith.constant dense<0.000000e+00> : vector<16x128xf32>
    %11 = tpu.matmul %9, %10, %cst_8 {dimension_numbers = #tpu.dot_dimension_numbers<[1], [0], [0], [1], [0, 0, 1, 1], [], []>} : vector<16x128xbf16>, vector<128x128xbf16>, vector<16x128xf32> -> vector<16x128xf32>
    %c0_9 = arith.constant 0 : index
    %c0_10 = arith.constant 0 : index
    %12 = vector.load %arg5[%c0_9, %c0_10] : memref<1x128xf32, #tpu.memory_space<vmem>>, vector<1x128xf32>
    %13 = vector.broadcast %12 : vector<1x128xf32> to vector<16x128xf32>
    %14 = arith.addf %11, %13 : vector<16x128xf32>
    %cst_11 = arith.constant 0.000000e+00 : f32
    %15 = vector.broadcast %cst_11 : f32 to vector<16x128xf32>
    %16 = arith.maximumf %14, %15 : vector<16x128xf32>
    %17 = arith.truncf %16 : vector<16x128xf32> to vector<16x128xbf16>
    %c0_12 = arith.constant 0 : index
    %c0_13 = arith.constant 0 : index
    %18 = vector.load %arg6[%c0_12, %c0_13] : memref<128x128xbf16, #tpu.memory_space<vmem>>, vector<128x128xbf16>
    %cst_14 = arith.constant dense<0.000000e+00> : vector<16x128xf32>
    %19 = tpu.matmul %17, %18, %cst_14 {dimension_numbers = #tpu.dot_dimension_numbers<[1], [0], [0], [1], [0, 0, 1, 1], [], []>} : vector<16x128xbf16>, vector<128x128xbf16>, vector<16x128xf32> -> vector<16x128xf32>
    %c0_15 = arith.constant 0 : index
    %c0_16 = arith.constant 0 : index
    %20 = vector.load %arg7[%c0_15, %c0_16] : memref<1x128xf32, #tpu.memory_space<vmem>>, vector<1x128xf32>
    %21 = vector.broadcast %20 : vector<1x128xf32> to vector<16x128xf32>
    %22 = arith.addf %19, %21 : vector<16x128xf32>
    %23 = arith.truncf %22 : vector<16x128xf32> to vector<16x128xbf16>
    %c0_17 = arith.constant 0 : index
    %c0_18 = arith.constant 0 : index
    %24 = vector.load %arg8[%c0_17, %c0_18] : memref<16x128xbf16, #tpu.memory_space<vmem>>, vector<16x128xbf16>
    tpu.vector_store %arg8[%c0_17, %c0_18], %23 {strides = array<i32>} : memref<16x128xbf16, #tpu.memory_space<vmem>>, vector<16x128xbf16>,
    return
  }
  func.func @transform_0(%arg0: i32) -> (i32, i32) {
    %c0_i32 = arith.constant 0 : i32
    %c0_i32_0 = arith.constant 0 : i32
    return %arg0, %c0_i32 : i32, i32
  }
  func.func @transform_1(%arg0: i32) -> (i32, i32) {
    %c0_i32 = arith.constant 0 : i32
    %c0_i32_0 = arith.constant 0 : i32
    %c0_i32_1 = arith.constant 0 : i32
    return %c0_i32, %c0_i32_0 : i32, i32
  }
  func.func @transform_2(%arg0: i32) -> (i32, i32) {
    %c0_i32 = arith.constant 0 : i32
    %c0_i32_0 = arith.constant 0 : i32
    %c0_i32_1 = arith.constant 0 : i32
    return %c0_i32, %c0_i32_0 : i32, i32
  }
  func.func @transform_3(%arg0: i32) -> (i32, i32) {
    %c0_i32 = arith.constant 0 : i32
    %c0_i32_0 = arith.constant 0 : i32
    %c0_i32_1 = arith.constant 0 : i32
    return %c0_i32, %c0_i32_0 : i32, i32
  }
  func.func @transform_4(%arg0: i32) -> (i32, i32) {
    %c0_i32 = arith.constant 0 : i32
    %c0_i32_0 = arith.constant 0 : i32
    %c0_i32_1 = arith.constant 0 : i32
    return %c0_i32, %c0_i32_0 : i32, i32
  }
  func.func @transform_5(%arg0: i32) -> (i32, i32) {
    %c0_i32 = arith.constant 0 : i32
    %c0_i32_0 = arith.constant 0 : i32
    %c0_i32_1 = arith.constant 0 : i32
    return %c0_i32, %c0_i32_0 : i32, i32
  }
  func.func @transform_6(%arg0: i32) -> (i32, i32) {
    %c0_i32 = arith.constant 0 : i32
    %c0_i32_0 = arith.constant 0 : i32
    %c0_i32_1 = arith.constant 0 : i32
    return %c0_i32, %c0_i32_0 : i32, i32
  }
  func.func @transform_7(%arg0: i32) -> (i32, i32) {
    %c0_i32 = arith.constant 0 : i32
    %c0_i32_0 = arith.constant 0 : i32
    return %arg0, %c0_i32 : i32, i32
  }
}

</mosaic_0001>

<llo_original>
// kernel: net_forward.1
$region0: #{net_forward.1}
  #allocation0 [shape = 'u32[]', space=smem, size = 0x4, offset = 0x4, fixed_abs, tag = 'smem constant byte address 0x4 - core index']
  #allocation1 [shape = 'u32[144,128]{1,0:T(1,128)}', space=vmem, size = 0x12000, scoped, tag = 'internal scratch']
  %s0 = inlined_call_operand.vmem [shape: f32[32,256], index: 0, kind: input, shape index: {}]
  %s1 = inlined_call_operand.vmem [shape: bf16[256,128], index: 1, kind: input, shape index: {}]
  %s2 = inlined_call_operand.vmem [shape: f32[1,128], index: 2, kind: input, shape index: {}]
  %s3 = inlined_call_operand.vmem [shape: bf16[128,128], index: 3, kind: input, shape index: {}]
  %s4 = inlined_call_operand.vmem [shape: f32[1,128], index: 4, kind: input, shape index: {}]
  %s5 = inlined_call_operand.vmem [shape: bf16[128,128], index: 5, kind: input, shape index: {}]
  %s6 = inlined_call_operand.vmem [shape: f32[1,128], index: 6, kind: input, shape index: {}]
  %s7 = inlined_call_operand.vmem [shape: bf16[32,128], index: 7, kind: output, shape index: {}]
  %s8 = sld [smem:[#allocation0]]
  $region61: #{net_forward.1} parent=0
    _
  %s10 = ssub.s32 1, %s8
  %s11 = scalar_select 0, %s10, %s8
  loop: start=0, step=1, limit=4
  $region2: #{net_forward.1} parent=0 // loop_pre_header
    _
  $region3: #{net_forward.1} parent=0 // loop_header
    %s13 = sphi 0, %s17
    %p14 = scmp.ge.s32.totalorder %s13, 4
    %s23 = sphi 0, %s25
    %s26 = sphi 0, %s23
    %s27 = sphi 0, %s26
    %s43 = sphi 0, %s27
    %s47 = sphi 0, %s47
    %s49 = sphi 0, %s47
    %s50 = sphi 0, %s49
    %s64 = sphi 0, %s50
    %s68 = sphi 0, %s68
    %s70 = sphi 0, %s68
    %s71 = sphi 0, %s70
    %s85 = sphi 0, %s71
    %s89 = sphi 0, %s89
    %s91 = sphi 0, %s89
    %s92 = sphi 0, %s91
    %s106 = sphi 0, %s92
    %s110 = sphi 0, %s110
    %s112 = sphi 0, %s110
    %s113 = sphi 0, %s112
    %s127 = sphi 0, %s113
    %s131 = sphi 0, %s131
    %s133 = sphi 0, %s131
    %s134 = sphi 0, %s133
    %s148 = sphi 0, %s134
    %s152 = sphi 0, %s152
    %s154 = sphi 0, %s152
    %s155 = sphi 0, %s154
    %s169 = sphi 0, %s155
    %s175 = sphi 0, %s177
    %s178 = sphi 0, %s175
    %s179 = sphi 0, %s178
    %s195 = sphi 0, %s179
  $region4: #{net_forward.1} parent=0 // loop_header_branch
    %16 = sbr.rel (%p14) target = $region8
  $region5: #{net_forward.1} parent=0 // loop_body
    %s18 = ssub.s32 %s13, 1
    %s19 = ssub.s32 %s13, 2
    %s20 = sadd.s32 %s13, 1
    %s21 = ssub.s32 %s13, %s20
    %p22 = scmp.eq.s32.totalorder %s21, 0
    %s24 = sadd.s32 %s23, 1
    %s25 = scalar_select %p22, %s23, %s24
    %p28 = pneg %p22
    %p29 = scmp.eq.s32.totalorder %s13, 1
    %p30 = por %p28, %p29
    %p31 = scmp.ne.s32.totalorder %s23, %s26
    %p32 = scmp.eq.s32.totalorder %s13, 0
    %p33 = por %p31, %p32
    %p34 = scmp.ne.s32.totalorder %s23, %s26
    %p35 = scmp.eq.s32.totalorder %s18, 1
    %p36 = por %p34, %p35
    %p37 = scmp.ne.s32.totalorder %s26, %s27
    %p38 = scmp.eq.s32.totalorder %s18, 0
    %p39 = por %p37, %p38
    %p40 = scmp.ne.s32.totalorder %s26, %s27
    %p41 = scmp.eq.s32.totalorder %s19, 1
    %p42 = por %p40, %p41
    %p44 = scmp.ne.s32.totalorder %s27, %s43
    %p45 = scmp.eq.s32.totalorder %s19, 0
    %p46 = por %p44, %p45
    %s48 = sadd.s32 %s47, 1
    %p51 = scmp.eq.s32.totalorder %s13, 1
    %p52 = scmp.ne.s32.totalorder %s47, %s49
    %p53 = scmp.eq.s32.totalorder %s13, 0
    %p54 = por %p52, %p53
    %p55 = scmp.ne.s32.totalorder %s47, %s49
    %p56 = scmp.eq.s32.totalorder %s18, 1
    %p57 = por %p55, %p56
    %p58 = scmp.ne.s32.totalorder %s49, %s50
    %p59 = scmp.eq.s32.totalorder %s18, 0
    %p60 = por %p58, %p59
    %p61 = scmp.ne.s32.totalorder %s49, %s50
    %p62 = scmp.eq.s32.totalorder %s19, 1
    %p63 = por %p61, %p62
    %p65 = scmp.ne.s32.totalorder %s50, %s64
    %p66 = scmp.eq.s32.totalorder %s19, 0
    %p67 = por %p65, %p66
    %s69 = sadd.s32 %s68, 1
    %p72 = scmp.eq.s32.totalorder %s13, 1
    %p73 = scmp.ne.s32.totalorder %s68, %s70
    %p74 = scmp.eq.s32.totalorder %s13, 0
    %p75 = por %p73, %p74
    %p76 = scmp.ne.s32.totalorder %s68, %s70
    %p77 = scmp.eq.s32.totalorder %s18, 1
    %p78 = por %p76, %p77
    %p79 = scmp.ne.s32.totalorder %s70, %s71
    %p80 = scmp.eq.s32.totalorder %s18, 0
    %p81 = por %p79, %p80
    %p82 = scmp.ne.s32.totalorder %s70, %s71
    %p83 = scmp.eq.s32.totalorder %s19, 1
    %p84 = por %p82, %p83
    %p86 = scmp.ne.s32.totalorder %s71, %s85
    %p87 = scmp.eq.s32.totalorder %s19, 0
    %p88 = por %p86, %p87
    %s90 = sadd.s32 %s89, 1
    %p93 = scmp.eq.s32.totalorder %s13, 1
    %p94 = scmp.ne.s32.totalorder %s89, %s91
    %p95 = scmp.eq.s32.totalorder %s13, 0
    %p96 = por %p94, %p95
    %p97 = scmp.ne.s32.totalorder %s89, %s91
    %p98 = scmp.eq.s32.totalorder %s18, 1
    %p99 = por %p97, %p98
    %p100 = scmp.ne.s32.totalorder %s91, %s92
    %p101 = scmp.eq.s32.totalorder %s18, 0
    %p102 = por %p100, %p101
    %p103 = scmp.ne.s32.totalorder %s91, %s92
    %p104 = scmp.eq.s32.totalorder %s19, 1
    %p105 = por %p103, %p104
    %p107 = scmp.ne.s32.totalorder %s92, %s106
    %p108 = scmp.eq.s32.totalorder %s19, 0
    %p109 = por %p107, %p108
    %s111 = sadd.s32 %s110, 1
    %p114 = scmp.eq.s32.totalorder %s13, 1
    %p115 = scmp.ne.s32.totalorder %s110, %s112
    %p116 = scmp.eq.s32.totalorder %s13, 0
    %p117 = por %p115, %p116
    %p118 = scmp.ne.s32.totalorder %s110, %s112
    %p119 = scmp.eq.s32.totalorder %s18, 1
    %p120 = por %p118, %p119
    %p121 = scmp.ne.s32.totalorder %s112, %s113
    %p122 = scmp.eq.s32.totalorder %s18, 0
    %p123 = por %p121, %p122
    %p124 = scmp.ne.s32.totalorder %s112, %s113
    %p125 = scmp.eq.s32.totalorder %s19, 1
    %p126 = por %p124, %p125
    %p128 = scmp.ne.s32.totalorder %s113, %s127
    %p129 = scmp.eq.s32.totalorder %s19, 0
    %p130 = por %p128, %p129
    %s132 = sadd.s32 %s131, 1
    %p135 = scmp.eq.s32.totalorder %s13, 1
    %p136 = scmp.ne.s32.totalorder %s131, %s133
    %p137 = scmp.eq.s32.totalorder %s13, 0
    %p138 = por %p136, %p137
    %p139 = scmp.ne.s32.totalorder %s131, %s133
    %p140 = scmp.eq.s32.totalorder %s18, 1
    %p141 = por %p139, %p140
    %p142 = scmp.ne.s32.totalorder %s133, %s134
    %p143 = scmp.eq.s32.totalorder %s18, 0
    %p144 = por %p142, %p143
    %p145 = scmp.ne.s32.totalorder %s133, %s134
    %p146 = scmp.eq.s32.totalorder %s19, 1
    %p147 = por %p145, %p146
    %p149 = scmp.ne.s32.totalorder %s134, %s148
    %p150 = scmp.eq.s32.totalorder %s19, 0
    %p151 = por %p149, %p150
    %s153 = sadd.s32 %s152, 1
    %p156 = scmp.eq.s32.totalorder %s13, 1
    %p157 = scmp.ne.s32.totalorder %s152, %s154
    %p158 = scmp.eq.s32.totalorder %s13, 0
    %p159 = por %p157, %p158
    %p160 = scmp.ne.s32.totalorder %s152, %s154
    %p161 = scmp.eq.s32.totalorder %s18, 1
    %p162 = por %p160, %p161
    %p163 = scmp.ne.s32.totalorder %s154, %s155
    %p164 = scmp.eq.s32.totalorder %s18, 0
    %p165 = por %p163, %p164
    %p166 = scmp.ne.s32.totalorder %s154, %s155
    %p167 = scmp.eq.s32.totalorder %s19, 1
    %p168 = por %p166, %p167
    %p170 = scmp.ne.s32.totalorder %s155, %s169
    %p171 = scmp.eq.s32.totalorder %s19, 0
    %p172 = por %p170, %p171
    %s173 = ssub.s32 %s13, %s20
    %p174 = scmp.eq.s32.totalorder %s173, 0
    %s176 = sadd.s32 %s175, 1
    %s177 = scalar_select %p174, %s175, %s176
    %p180 = pneg %p174
    %p181 = scmp.eq.s32.totalorder %s13, 1
    %p182 = por %p180, %p181
    %p183 = scmp.ne.s32.totalorder %s175, %s178
    %p184 = scmp.eq.s32.totalorder %s13, 0
    %p185 = por %p183, %p184
    %p186 = scmp.ne.s32.totalorder %s175, %s178
    %p187 = scmp.eq.s32.totalorder %s18, 1
    %p188 = por %p186, %p187
    %p189 = scmp.ne.s32.totalorder %s178, %s179
    %p190 = scmp.eq.s32.totalorder %s18, 0
    %p191 = por %p189, %p190
    %p192 = scmp.ne.s32.totalorder %s178, %s179
    %p193 = scmp.eq.s32.totalorder %s19, 1
    %p194 = por %p192, %p193
    %p196 = scmp.ne.s32.totalorder %s179, %s195
    %p197 = scmp.eq.s32.totalorder %s19, 0
    %p198 = por %p196, %p197
    %p199 = scmp.le.s32.totalorder 1, %s13
    %p200 = scmp.lt.s32.totalorder %s13, 3
    %p201 = pnand %p199, %p200
    %p202 = pneg %p201
    // Predicated region
    $region9: #{net_forward.1} parent=5 // pred_check
      _
    $region10: #{net_forward.1} parent=5 // pred_check_branch
      %204 = sbr.rel (%p201) target = $region12
    $region11: #{net_forward.1} parent=5 // pred_region
      %s205 = ssub.s32 %s13, 1
      // Predicated region
      $region13: #{net_forward.1} parent=11 // pred_check
        %p206 = pneg %p60
      $region14: #{net_forward.1} parent=11 // pred_check_branch
        %208 = sbr.rel (%p206) target = $region16
      $region15: #{net_forward.1} parent=11 // pred_region
        _
      $region16: #{net_forward.1} parent=11 // pred_fallthru
        _
      // Predicated region
      $region17: #{net_forward.1} parent=11 // pred_check
        %p209 = pneg %p81
      $region18: #{net_forward.1} parent=11 // pred_check_branch
        %211 = sbr.rel (%p209) target = $region20
      $region19: #{net_forward.1} parent=11 // pred_region
        _
      $region20: #{net_forward.1} parent=11 // pred_fallthru
        _
      // Predicated region
      $region21: #{net_forward.1} parent=11 // pred_check
        %p212 = pneg %p102
      $region22: #{net_forward.1} parent=11 // pred_check_branch
        %214 = sbr.rel (%p212) target = $region24
      $region23: #{net_forward.1} parent=11 // pred_region
        _
      $region24: #{net_forward.1} parent=11 // pred_fallthru
        _
      // Predicated region
      $region25: #{net_forward.1} parent=11 // pred_check
        %p215 = pneg %p123
      $region26: #{net_forward.1} parent=11 // pred_check_branch
        %217 = sbr.rel (%p215) target = $region28
      $region27: #{net_forward.1} parent=11 // pred_region
        _
      $region28: #{net_forward.1} parent=11 // pred_fallthru
        _
      // Predicated region
      $region29: #{net_forward.1} parent=11 // pred_check
        %p218 = pneg %p144
      $region30: #{net_forward.1} parent=11 // pred_check_branch
        %220 = sbr.rel (%p218) target = $region32
      $region31: #{net_forward.1} parent=11 // pred_region
        _
      $region32: #{net_forward.1} parent=11 // pred_fallthru
        _
      // Predicated region
      $region33: #{net_forward.1} parent=11 // pred_check
        %p221 = pneg %p165
      $region34: #{net_forward.1} parent=11 // pred_check_branch
        %223 = sbr.rel (%p221) target = $region36
      $region35: #{net_forward.1} parent=11 // pred_region
        _
      $region36: #{net_forward.1} parent=11 // pred_fallthru
        _
    $region12: #{net_forward.1} parent=5 // pred_fallthru
      _
    %p224 = scmp.lt.s32.totalorder %s13, 2
    // Predicated region
    $region37: #{net_forward.1} parent=5 // pred_check
      %p225 = pneg %p224
    $region38: #{net_forward.1} parent=5 // pred_check_branch
      %227 = sbr.rel (%p225) target = $region40
    $region39: #{net_forward.1} parent=5 // pred_region
      // Predicated region
      $region41: #{net_forward.1} parent=39 // pred_check
        %p228 = pneg %p33
      $region42: #{net_forward.1} parent=39 // pred_check_branch
        %230 = sbr.rel (%p228) target = $region44
      $region43: #{net_forward.1} parent=39 // pred_region
        %s231 = smul.u32 2, %s13
        %p232 = scmp.lt.s32.totalorder %s231, 3
        %s233 = scalar_select %p232, %s231, 3
        %s234 = smul.addr %s233, 2
        %s235 = smul.addr %s234, 8
        %s236 = scalar_lea.vmem %s0, %s235
        %s237 = smul.u32 2, %s13
      $region44: #{net_forward.1} parent=39 // pred_fallthru
        _
    $region40: #{net_forward.1} parent=5 // pred_fallthru
      _
    %p238 = scmp.le.s32.totalorder 1, %s13
    %p239 = scmp.lt.s32.totalorder %s13, 3
    %p240 = pnand %p238, %p239
    %p241 = pneg %p240
    // Predicated region
    $region45: #{net_forward.1} parent=5 // pred_check
      _
    $region46: #{net_forward.1} parent=5 // pred_check_branch
      %243 = sbr.rel (%p240) target = $region48
    $region47: #{net_forward.1} parent=5 // pred_region
      %s244 = ssub.s32 %s13, 1
      %s245 = smul.u32 2, %s18
      %p246 = scmp.lt.s32.totalorder %s245, 3
      %s247 = scalar_select %p246, %s245, 3
      %s248 = smul.addr %s247, 2
      %s249 = smul.addr %s248, 8
      %s250 = scalar_lea.vmem %s0, %s249
      %p251 = pneg %p39
      %p252 = pneg %p36
      %p253 = pneg %p60
      %p254 = pneg %p57
      %p255 = pneg %p81
      %p256 = pneg %p78
      %p257 = pneg %p102
      %p258 = pneg %p99
      %p259 = pneg %p123
      %p260 = pneg %p120
      %p261 = pneg %p144
      %p262 = pneg %p141
      %p263 = pneg %p165
      %p264 = pneg %p162
      %p265 = pneg %p191
      %p266 = pneg %p188
      %s267 = smul.u32 2, %s18
      %p268 = scmp.lt.s32.totalorder %s267, 3
      %s269 = scalar_select %p268, %s267, 3
      %s270 = smul.addr %s269, 4
      %s271 = scalar_lea.vmem %s7, %s270
      %s272 = smul.u32 2, %s18
      %p273 = scmp.lt.s32.totalorder %s272, 3
      %s274 = scalar_select %p273, %s272, 3
      %s275 = smul.addr %s274, 2
      %s276 = smul.addr %s275, 8
      %s277 = scalar_lea.vmem %s0, %s276
      %s278 = smul.u32 2, %s18
      %s279 = smul.u32 2, %s18
      %p280 = scmp.lt.s32.totalorder %s279, 3
      %s281 = scalar_select %p280, %s279, 3
      %s282 = smul.addr %s281, 4
      %s283 = scalar_lea.vmem %s7, %s282
      %s284 = smul.u32 2, %s18
      %v286 = vld [vmem:[%s277] sm:$0xff]
      %v287 = vld [vmem:[%s277 + $0x8] sm:$0xff]
      %v288 = vld [vmem:[%s277 + $0x10] sm:$0xff]
      %v289 = vld [vmem:[%s277 + $0x18] sm:$0xff]
      %v290 = vpack.c.bf16 %v288, %v286
      %v291 = vpack.c.bf16 %v289, %v287
      %v292 = vld [vmem:[%s1] sm:$0xf]
      %v293 = vld [vmem:[%s1 + $0x4] sm:$0xf]
      %v294 = vld [vmem:[%s1 + $0x8] sm:$0xf]
      %v295 = vld [vmem:[%s1 + $0xc] sm:$0xf]
      %v296 = vld [vmem:[%s1 + $0x10] sm:$0xf]
      %v297 = vld [vmem:[%s1 + $0x14] sm:$0xf]
      %v298 = vld [vmem:[%s1 + $0x18] sm:$0xf]
      %v299 = vld [vmem:[%s1 + $0x1c] sm:$0xf]
      %v300 = vld [vmem:[%s1 + $0x20] sm:$0xf]
      %v301 = vld [vmem:[%s1 + $0x24] sm:$0xf]
      %v302 = vld [vmem:[%s1 + $0x28] sm:$0xf]
      %v303 = vld [vmem:[%s1 + $0x2c] sm:$0xf]
      %v304 = vld [vmem:[%s1 + $0x30] sm:$0xf]
      %v305 = vld [vmem:[%s1 + $0x34] sm:$0xf]
      %v306 = vld [vmem:[%s1 + $0x38] sm:$0xf]
      %v307 = vld [vmem:[%s1 + $0x3c] sm:$0xf]
      %v308 = vld [vmem:[%s1 + $0x40] sm:$0xf]
      %v309 = vld [vmem:[%s1 + $0x44] sm:$0xf]
      %v310 = vld [vmem:[%s1 + $0x48] sm:$0xf]
      %v311 = vld [vmem:[%s1 + $0x4c] sm:$0xf]
      %v312 = vld [vmem:[%s1 + $0x50] sm:$0xf]
      %v313 = vld [vmem:[%s1 + $0x54] sm:$0xf]
      %v314 = vld [vmem:[%s1 + $0x58] sm:$0xf]
      %v315 = vld [vmem:[%s1 + $0x5c] sm:$0xf]
      %v316 = vld [vmem:[%s1 + $0x60] sm:$0xf]
      %v317 = vld [vmem:[%s1 + $0x64] sm:$0xf]
      %v318 = vld [vmem:[%s1 + $0x68] sm:$0xf]
      %v319 = vld [vmem:[%s1 + $0x6c] sm:$0xf]
      %v320 = vld [vmem:[%s1 + $0x70] sm:$0xf]
      %v321 = vld [vmem:[%s1 + $0x74] sm:$0xf]
      %v322 = vld [vmem:[%s1 + $0x78] sm:$0xf]
      %v323 = vld [vmem:[%s1 + $0x7c] sm:$0xf]
      %v324 = vld [vmem:[%s2] sm:$0x1]
      %v326 = vlaneseq
      %v327 = vshrl.u32 %v326, 7
      %v328 = vsub.s32 0, %v327
      %v329 = vrot.slane %v324, %v328
      %v363 = vunpack.c.l.b16 %v292
      %v364 = vunpack.c.l.b16 %v293
      %v365 = vunpack.c.l.b16 %v294
      %v366 = vunpack.c.l.b16 %v295
      %v367 = vunpack.c.l.b16 %v296
      %v368 = vunpack.c.l.b16 %v297
      %v369 = vunpack.c.l.b16 %v298
      %v370 = vunpack.c.l.b16 %v299
      %v371 = vunpack.c.l.b16 %v300
      %v372 = vunpack.c.l.b16 %v301
      %v373 = vunpack.c.l.b16 %v302
      %v374 = vunpack.c.l.b16 %v303
      %v375 = vunpack.c.l.b16 %v304
      %v376 = vunpack.c.l.b16 %v305
      %v377 = vunpack.c.l.b16 %v306
      %v378 = vunpack.c.l.b16 %v307
      %v379 = vunpack.c.l.b16 %v308
      %v380 = vunpack.c.l.b16 %v309
      %v381 = vunpack.c.l.b16 %v310
      %v382 = vunpack.c.l.b16 %v311
      %v383 = vunpack.c.l.b16 %v312
      %v384 = vunpack.c.l.b16 %v313
      %v385 = vunpack.c.l.b16 %v314
      %v386 = vunpack.c.l.b16 %v315
      %v387 = vunpack.c.l.b16 %v316
      %v388 = vunpack.c.l.b16 %v317
      %v389 = vunpack.c.l.b16 %v318
      %v390 = vunpack.c.l.b16 %v319
      %v391 = vunpack.c.l.b16 %v320
      %v392 = vunpack.c.l.b16 %v321
      %v393 = vunpack.c.l.b16 %v322
      %v394 = vunpack.c.l.b16 %v323
      %v395 = vpack.c.b16 %v364, %v363
      %v396 = vpack.c.b16 %v366, %v365
      %v397 = vpack.c.b16 %v368, %v367
      %v398 = vpack.c.b16 %v370, %v369
      %v399 = vpack.c.b16 %v372, %v371
      %v400 = vpack.c.b16 %v374, %v373
      %v401 = vpack.c.b16 %v376, %v375
      %v402 = vpack.c.b16 %v378, %v377
      %v403 = vpack.c.b16 %v380, %v379
      %v404 = vpack.c.b16 %v382, %v381
      %v405 = vpack.c.b16 %v384, %v383
      %v406 = vpack.c.b16 %v386, %v385
      %v407 = vpack.c.b16 %v388, %v387
      %v408 = vpack.c.b16 %v390, %v389
      %v409 = vpack.c.b16 %v392, %v391
      %v410 = vpack.c.b16 %v394, %v393
      %427 = vmatprep.subr.bf16.mxu0 0
      %428 = vmatpush1.bf16.msra.mxu0 %v402
      %429 = vmatprep.subr.bf16.mxu0 0
      %430 = vmatpush1.bf16.msra.mxu0 %v401
      %431 = vmatprep.subr.bf16.mxu0 0
      %432 = vmatpush1.bf16.msra.mxu0 %v400
      %433 = vmatprep.subr.bf16.mxu0 0
      %434 = vmatpush1.bf16.msra.mxu0 %v399
      %435 = vmatprep.subr.bf16.mxu0 0
      %436 = vmatpush1.bf16.msra.mxu0 %v398
      %437 = vmatprep.subr.bf16.mxu0 0
      %438 = vmatpush1.bf16.msra.mxu0 %v397
      %439 = vmatprep.subr.bf16.mxu0 0
      %440 = vmatpush1.bf16.msra.mxu0 %v396
      %441 = vmatprep.subr.bf16.mxu0 0
      %442 = vmatpush1.bf16.msra.mxu0 %v395
      %443 = vmatprep.subr.bf16.mxu0 0
      %444 = vmatpush2.bf16.msra.mxu0 %v410
      %445 = vmatprep.subr.bf16.mxu0 0
      %446 = vmatpush2.bf16.msra.mxu0 %v409
      %447 = vmatprep.subr.bf16.mxu0 0
      %448 = vmatpush2.bf16.msra.mxu0 %v408
      %449 = vmatprep.subr.bf16.mxu0 0
      %450 = vmatpush2.bf16.msra.mxu0 %v407
      %451 = vmatprep.subr.bf16.mxu0 0
      %452 = vmatpush2.bf16.msra.mxu0 %v406
      %453 = vmatprep.subr.bf16.mxu0 0
      %454 = vmatpush2.bf16.msra.mxu0 %v405
      %455 = vmatprep.subr.bf16.mxu0 0
      %456 = vmatpush2.bf16.msra.mxu0 %v404
      %457 = vmatprep.subr.bf16.mxu0 0
      %458 = vmatpush2.bf16.msra.mxu0 %v403
      %459 = vmatprep.mubr.bf16.mxu0 %v291
      %460 = vmatmul.mubr.bf16.gmra.mxu0 %v290
      %v461 = vpop.f32.mrf.mxu0
      %v462 = vadd.f32 %v329, %v461
      %v463 = vpop.f32.mrf.mxu0
      %v464 = vpop.f32.mrf.mxu0
      %v465 = vadd.f32 %v329, %v464
      %v466 = vpop.f32.mrf.mxu0
      %467 = vdwg.mxu0
      %v468 = vmax.f32 %v462, 0.0
      %v469 = vmax.f32 %v465, 0.0
      %v470 = vpack.c.bf16 %v469, %v468
      %v471 = vld [vmem:[%s3] sm:$0xf]
      %v472 = vld [vmem:[%s3 + $0x4] sm:$0xf]
      %v473 = vld [vmem:[%s3 + $0x8] sm:$0xf]
      %v474 = vld [vmem:[%s3 + $0xc] sm:$0xf]
      %v475 = vld [vmem:[%s3 + $0x10] sm:$0xf]
      %v476 = vld [vmem:[%s3 + $0x14] sm:$0xf]
      %v477 = vld [vmem:[%s3 + $0x18] sm:$0xf]
      %v478 = vld [vmem:[%s3 + $0x1c] sm:$0xf]
      %v479 = vld [vmem:[%s3 + $0x20] sm:$0xf]
      %v480 = vld [vmem:[%s3 + $0x24] sm:$0xf]
      %v481 = vld [vmem:[%s3 + $0x28] sm:$0xf]
      %v482 = vld [vmem:[%s3 + $0x2c] sm:$0xf]
      %v483 = vld [vmem:[%s3 + $0x30] sm:$0xf]
      %v484 = vld [vmem:[%s3 + $0x34] sm:$0xf]
      %v485 = vld [vmem:[%s3 + $0x38] sm:$0xf]
      %v486 = vld [vmem:[%s3 + $0x3c] sm:$0xf]
      %v487 = vld [vmem:[%s4] sm:$0x1]
      %v489 = vlaneseq
      %v490 = vshrl.u32 %v489, 7
      %v491 = vsub.s32 0, %v490
      %v492 = vrot.slane %v487, %v491
      %v510 = vunpack.c.l.b16 %v471
      %v511 = vunpack.c.l.b16 %v472
      %v512 = vunpack.c.l.b16 %v473
      %v513 = vunpack.c.l.b16 %v474
      %v514 = vunpack.c.l.b16 %v475
      %v515 = vunpack.c.l.b16 %v476
      %v516 = vunpack.c.l.b16 %v477
      %v517 = vunpack.c.l.b16 %v478
      %v518 = vunpack.c.l.b16 %v479
      %v519 = vunpack.c.l.b16 %v480
      %v520 = vunpack.c.l.b16 %v481
      %v521 = vunpack.c.l.b16 %v482
      %v522 = vunpack.c.l.b16 %v483
      %v523 = vunpack.c.l.b16 %v484
      %v524 = vunpack.c.l.b16 %v485
      %v525 = vunpack.c.l.b16 %v486
      %v526 = vpack.c.b16 %v511, %v510
      %v527 = vpack.c.b16 %v513, %v512
      %v528 = vpack.c.b16 %v515, %v514
      %v529 = vpack.c.b16 %v517, %v516
      %v530 = vpack.c.b16 %v519, %v518
      %v531 = vpack.c.b16 %v521, %v520
      %v532 = vpack.c.b16 %v523, %v522
      %v533 = vpack.c.b16 %v525, %v524
      %542 = vmatprep.subr.bf16.mxu0 0
      %543 = vmatpush1.bf16.msra.mxu0 %v533
      %544 = vmatprep.subr.bf16.mxu0 0
      %545 = vmatpush1.bf16.msra.mxu0 %v532
      %546 = vmatprep.subr.bf16.mxu0 0
      %547 = vmatpush1.bf16.msra.mxu0 %v531
      %548 = vmatprep.subr.bf16.mxu0 0
      %549 = vmatpush1.bf16.msra.mxu0 %v530
      %550 = vmatprep.subr.bf16.mxu0 0
      %551 = vmatpush1.bf16.msra.mxu0 %v529
      %552 = vmatprep.subr.bf16.mxu0 0
      %553 = vmatpush1.bf16.msra.mxu0 %v528
      %554 = vmatprep.subr.bf16.mxu0 0
      %555 = vmatpush1.bf16.msra.mxu0 %v527
      %556 = vmatprep.subr.bf16.mxu0 0
      %557 = vmatpush1.bf16.msra.mxu0 %v526
      %558 = vmatprep.subr.bf16.mxu0 0
      %559 = vmatpush2.bf16.msra.mxu0 0
      %560 = vmatprep.subr.bf16.mxu0 0
      %561 = vmatpush2.bf16.msra.mxu0 0
      %562 = vmatprep.subr.bf16.mxu0 0
      %563 = vmatpush2.bf16.msra.mxu0 0
      %564 = vmatprep.subr.bf16.mxu0 0
      %565 = vmatpush2.bf16.msra.mxu0 0
      %566 = vmatprep.subr.bf16.mxu0 0
      %567 = vmatpush2.bf16.msra.mxu0 0
      %568 = vmatprep.subr.bf16.mxu0 0
      %569 = vmatpush2.bf16.msra.mxu0 0
      %570 = vmatprep.subr.bf16.mxu0 0
      %571 = vmatpush2.bf16.msra.mxu0 0
      %572 = vmatprep.subr.bf16.mxu0 0
      %573 = vmatpush2.bf16.msra.mxu0 0
      %574 = vmatprep.mubr.bf16.mxu0 0
      %575 = vmatmul.mubr.bf16.gmra.mxu0 %v470
      %v576 = vpop.f32.mrf.mxu0
      %v577 = vadd.f32 %v492, %v576
      %v578 = vpop.f32.mrf.mxu0
      %v579 = vpop.f32.mrf.mxu0
      %v580 = vadd.f32 %v492, %v579
      %v581 = vpop.f32.mrf.mxu0
      %582 = vdwg.mxu0
      %v583 = vmax.f32 %v577, 0.0
      %v584 = vmax.f32 %v580, 0.0
      %v585 = vpack.c.bf16 %v584, %v583
      %v586 = vld [vmem:[%s5] sm:$0xf]
      %v587 = vld [vmem:[%s5 + $0x4] sm:$0xf]
      %v588 = vld [vmem:[%s5 + $0x8] sm:$0xf]
      %v589 = vld [vmem:[%s5 + $0xc] sm:$0xf]
      %v590 = vld [vmem:[%s5 + $0x10] sm:$0xf]
      %v591 = vld [vmem:[%s5 + $0x14] sm:$0xf]
      %v592 = vld [vmem:[%s5 + $0x18] sm:$0xf]
      %v593 = vld [vmem:[%s5 + $0x1c] sm:$0xf]
      %v594 = vld [vmem:[%s5 + $0x20] sm:$0xf]
      %v595 = vld [vmem:[%s5 + $0x24] sm:$0xf]
      %v596 = vld [vmem:[%s5 + $0x28] sm:$0xf]
      %v597 = vld [vmem:[%s5 + $0x2c] sm:$0xf]
      %v598 = vld [vmem:[%s5 + $0x30] sm:$0xf]
      %v599 = vld [vmem:[%s5 + $0x34] sm:$0xf]
      %v600 = vld [vmem:[%s5 + $0x38] sm:$0xf]
      %v601 = vld [vmem:[%s5 + $0x3c] sm:$0xf]
      %v602 = vld [vmem:[%s6] sm:$0x1]
      %v604 = vlaneseq
      %v605 = vshrl.u32 %v604, 7
      %v606 = vsub.s32 0, %v605
      %v607 = vrot.slane %v602, %v606
      %v625 = vunpack.c.l.b16 %v586
      %v626 = vunpack.c.l.b16 %v587
      %v627 = vunpack.c.l.b16 %v588
      %v628 = vunpack.c.l.b16 %v589
      %v629 = vunpack.c.l.b16 %v590
      %v630 = vunpack.c.l.b16 %v591
      %v631 = vunpack.c.l.b16 %v592
      %v632 = vunpack.c.l.b16 %v593
      %v633 = vunpack.c.l.b16 %v594
      %v634 = vunpack.c.l.b16 %v595
      %v635 = vunpack.c.l.b16 %v596
      %v636 = vunpack.c.l.b16 %v597
      %v637 = vunpack.c.l.b16 %v598
      %v638 = vunpack.c.l.b16 %v599
      %v639 = vunpack.c.l.b16 %v600
      %v640 = vunpack.c.l.b16 %v601
      %v641 = vpack.c.b16 %v626, %v625
      %v642 = vpack.c.b16 %v628, %v627
      %v643 = vpack.c.b16 %v630, %v629
      %v644 = vpack.c.b16 %v632, %v631
      %v645 = vpack.c.b16 %v634, %v633
      %v646 = vpack.c.b16 %v636, %v635
      %v647 = vpack.c.b16 %v638, %v637
      %v648 = vpack.c.b16 %v640, %v639
      %657 = vmatprep.subr.bf16.mxu0 0
      %658 = vmatpush1.bf16.msra.mxu0 %v648
      %659 = vmatprep.subr.bf16.mxu0 0
      %660 = vmatpush1.bf16.msra.mxu0 %v647
      %661 = vmatprep.subr.bf16.mxu0 0
      %662 = vmatpush1.bf16.msra.mxu0 %v646
      %663 = vmatprep.subr.bf16.mxu0 0
      %664 = vmatpush1.bf16.msra.mxu0 %v645
      %665 = vmatprep.subr.bf16.mxu0 0
      %666 = vmatpush1.bf16.msra.mxu0 %v644
      %667 = vmatprep.subr.bf16.mxu0 0
      %668 = vmatpush1.bf16.msra.mxu0 %v643
      %669 = vmatprep.subr.bf16.mxu0 0
      %670 = vmatpush1.bf16.msra.mxu0 %v642
      %671 = vmatprep.subr.bf16.mxu0 0
      %672 = vmatpush1.bf16.msra.mxu0 %v641
      %673 = vmatprep.subr.bf16.mxu0 0
      %674 = vmatpush2.bf16.msra.mxu0 0
      %675 = vmatprep.subr.bf16.mxu0 0
      %676 = vmatpush2.bf16.msra.mxu0 0
      %677 = vmatprep.subr.bf16.mxu0 0
      %678 = vmatpush2.bf16.msra.mxu0 0
      %679 = vmatprep.subr.bf16.mxu0 0
      %680 = vmatpush2.bf16.msra.mxu0 0
      %681 = vmatprep.subr.bf16.mxu0 0
      %682 = vmatpush2.bf16.msra.mxu0 0
      %683 = vmatprep.subr.bf16.mxu0 0
      %684 = vmatpush2.bf16.msra.mxu0 0
      %685 = vmatprep.subr.bf16.mxu0 0
      %686 = vmatpush2.bf16.msra.mxu0 0
      %687 = vmatprep.subr.bf16.mxu0 0
      %688 = vmatpush2.bf16.msra.mxu0 0
      %689 = vmatprep.mubr.bf16.mxu0 0
      %690 = vmatmul.mubr.bf16.gmra.mxu0 %v585
      %v691 = vpop.f32.mrf.mxu0
      %v692 = vadd.f32 %v607, %v691
      %v693 = vpop.f32.mrf.mxu0
      %v694 = vpop.f32.mrf.mxu0
      %v695 = vadd.f32 %v607, %v694
      %v696 = vpop.f32.mrf.mxu0
      %697 = vdwg.mxu0
      %v698 = vpack.c.bf16 %v695, %v692
      %v700 = vunpack.c.l.b16 %v698
      %v701 = vunpack.c.h.b16 %v698
      %v702 = vpack.c.b16 %v700, %v700
      %v703 = vpack.c.b16 %v701, %v701
      %706 = vst [vmem:[%s283] sm:$0xf] %v702
      %707 = vst [vmem:[%s283 + $0x4] sm:$0xf] %v703
      %s708 = smul.u32 2, %s18
      %p709 = scmp.lt.s32.totalorder %s708, 3
      %s710 = scalar_select %p709, %s708, 3
      %s711 = smul.addr %s710, 4
      %s712 = scalar_lea.vmem %s7, %s711
      // Predicated region
      $region49: #{net_forward.1} parent=47 // pred_check
        %p713 = pneg %p188
      $region50: #{net_forward.1} parent=47 // pred_check_branch
        %715 = sbr.rel (%p713) target = $region52
      $region51: #{net_forward.1} parent=47 // pred_region
        %s716 = smul.u32 2, %s18
      $region52: #{net_forward.1} parent=47 // pred_fallthru
        _
    $region48: #{net_forward.1} parent=5 // pred_fallthru
      _
    %p717 = scmp.le.s32.totalorder 2, %s13
    // Predicated region
    $region53: #{net_forward.1} parent=5 // pred_check
      %p718 = pneg %p717
    $region54: #{net_forward.1} parent=5 // pred_check_branch
      %720 = sbr.rel (%p718) target = $region56
    $region55: #{net_forward.1} parent=5 // pred_region
      %s721 = ssub.s32 %s13, 2
      // Predicated region
      $region57: #{net_forward.1} parent=55 // pred_check
        %p722 = pneg %p194
      $region58: #{net_forward.1} parent=55 // pred_check_branch
        %724 = sbr.rel (%p722) target = $region60
      $region59: #{net_forward.1} parent=55 // pred_region
        %s725 = smul.u32 2, %s19
        %p726 = scmp.lt.s32.totalorder %s725, 3
        %s727 = scalar_select %p726, %s725, 3
        %s728 = smul.addr %s727, 4
        %s729 = scalar_lea.vmem %s7, %s728
      $region60: #{net_forward.1} parent=55 // pred_fallthru
        _
    $region56: #{net_forward.1} parent=5 // pred_fallthru
      _
  $region6: #{net_forward.1} parent=0 // loop_footer
    %s17 = sadd.s32 1, %s13
  $region7: #{net_forward.1} parent=0 // loop_footer_branch
    %12 = sbr.rel target = $region3
  $region8: #{net_forward.1} parent=0 // loop_exit
    _

</llo_original>
